<compile_context>
chip_gen: v7x
topology: tpu7x:2x2x1
jax: 0.10.0
libtpu: 0.0.40
codegen_flags: <defaults>
</compile_context>

<pallas_src>
import jax
import jax.numpy as jnp
from jax.experimental import pallas as pl
from jax.experimental.pallas import tpu as pltpu


def mlp_kernel(x_ref, w1_ref, b1_ref, w2_ref, b2_ref, w3_ref, b3_ref, o_ref):
    x = x_ref[...]  # (TB, in_dim) bf16

    # Layer 1: Linear + ReLU (MXU bf16 matmul, f32 accumulation)
    h1 = jnp.dot(x, w1_ref[...], preferred_element_type=jnp.float32) + b1_ref[...]
    h1 = jnp.maximum(h1, 0.0)

    # Layer 2: Linear + ReLU
    h2 = jnp.dot(h1.astype(w2_ref.dtype), w2_ref[...],
                 preferred_element_type=jnp.float32) + b2_ref[...]
    h2 = jnp.maximum(h2, 0.0)

    # Output layer: Linear (no activation)
    out = jnp.dot(h2.astype(w3_ref.dtype), w3_ref[...],
                  preferred_element_type=jnp.float32) + b3_ref[...]
    o_ref[...] = out.astype(o_ref.dtype)


def _round_up(n, m):
    return ((n + m - 1) // m) * m


def mlp_forward(x, params, compute_dtype=jnp.bfloat16, max_tile=1024):
    """x: (B, in_dim) f32; params: PyTorch-layout weights (W: (out, in), b: (out,))."""
    B, in_dim = x.shape
    n_classes = params["w3"].shape[0]
    h1_dim = params["w1"].shape[0]
    h2_dim = params["w2"].shape[0]

    # Batch tile: multiple of 8, capped for VMEM headroom on all generations.
    TB = min(max_tile, _round_up(B, 8))
    B_pad = _round_up(B, TB)

    x_p = x
    if B_pad != B:
        x_p = jnp.pad(x, ((0, B_pad - B), (0, 0)))
    x_p = x_p.astype(compute_dtype)

    # Glue: transpose weights to (in, out) so kernel computes y = x @ W + b
    # (matches PyTorch y = x @ W.T + b). Weights in compute_dtype, biases f32.
    w1t = params["w1"].T.astype(compute_dtype)
    w2t = params["w2"].T.astype(compute_dtype)
    w3t = params["w3"].T.astype(compute_dtype)
    b1 = params["b1"].reshape(1, -1).astype(jnp.float32)
    b2 = params["b2"].reshape(1, -1).astype(jnp.float32)
    b3 = params["b3"].reshape(1, -1).astype(jnp.float32)

    # Resident (fetched-once) full-array blocks for weights/biases.
    resident = lambda arr: pl.BlockSpec(arr.shape, lambda i: (0, 0))

    out_p = pl.pallas_call(
        mlp_kernel,
        out_shape=jax.ShapeDtypeStruct((B_pad, n_classes), jnp.float32),
        grid=(B_pad // TB,),
        in_specs=[
            pl.BlockSpec((TB, in_dim), lambda i: (i, 0)),   # x: batch-tiled
            resident(w1t), resident(b1),
            resident(w2t), resident(b2),
            resident(w3t), resident(b3),
        ],
        out_specs=pl.BlockSpec((TB, n_classes), lambda i: (i, 0)),
        compiler_params=pltpu.CompilerParams(
            dimension_semantics=("parallel",)),
    )(x_p, w1t, b1, w2t, b2, w3t, b3)

    return out_p[:B]


def init_params(key, in_dim=187, hidden=(128, 64), n_classes=6):
    """Deterministic init mimicking nn.Linear's uniform(-1/sqrt(fan_in), 1/sqrt(fan_in))."""
    dims = [in_dim, *hidden, n_classes]
    params = {}
    for i in range(len(dims) - 1):
        fan_in, fan_out = dims[i], dims[i + 1]
        key, kw, kb = jax.random.split(key, 3)
        bound = 1.0 / jnp.sqrt(fan_in)
        params[f"w{i+1}"] = jax.random.uniform(
            kw, (fan_out, fan_in), jnp.float32, -bound, bound)
        params[f"b{i+1}"] = jax.random.uniform(
            kb, (fan_out,), jnp.float32, -bound, bound)
    return params


def mlp_reference_f32(x, params):
    """Pure-f32 reference (matches the PyTorch module's math)."""
    h = jnp.maximum(x @ params["w1"].T + params["b1"], 0.0)
    h = jnp.maximum(h @ params["w2"].T + params["b2"], 0.0)
    return h @ params["w3"].T + params["b3"]


def mlp_reference_matched(x, params, compute_dtype=jnp.bfloat16):
    """Reference with the kernel's exact precision recipe (bf16 inputs, f32 acc)."""
    cd = compute_dtype
    h = jnp.dot(x.astype(cd), params["w1"].T.astype(cd),
                preferred_element_type=jnp.float32) + params["b1"]
    h = jnp.maximum(h, 0.0)
    h = jnp.dot(h.astype(cd), params["w2"].T.astype(cd),
                preferred_element_type=jnp.float32) + params["b2"]
    h = jnp.maximum(h, 0.0)
    return jnp.dot(h.astype(cd), params["w3"].T.astype(cd),
                   preferred_element_type=jnp.float32) + params["b3"]


if __name__ == "__main__":
    key = jax.random.PRNGKey(0)
    key, kx = jax.random.split(key)

    B, in_dim = 8, 187
    x = jax.random.normal(kx, (B, in_dim), jnp.float32)
    params = init_params(key, in_dim=in_dim, hidden=(128, 64), n_classes=6)

    out = mlp_forward(x, params)
    out = jax.block_until_ready(out)
    assert out.shape == (B, 6)

    # Exact-precision check (same bf16-rounding recipe as the kernel).
    ref_matched = mlp_reference_matched(x, params)
    assert jnp.allclose(out, ref_matched, atol=1e-4, rtol=1e-4)

    # Loose sanity check against the full-f32 PyTorch-equivalent math.
    ref_f32 = mlp_reference_f32(x, params)
    assert jnp.allclose(out, ref_f32, atol=1e-1, rtol=1e-1)

    print("KERNEL_OK")
</pallas_src>

<mosaic_0001>
module attributes {stable_mosaic.version = 11 : i64} {
  func.func @mlp_kernel(%arg0: i32, %arg1: memref<8x187xbf16, #tpu.memory_space<vmem>>, %arg2: memref<187x128xbf16, #tpu.memory_space<vmem>>, %arg3: memref<1x128xf32, #tpu.memory_space<vmem>>, %arg4: memref<128x64xbf16, #tpu.memory_space<vmem>>, %arg5: memref<1x64xf32, #tpu.memory_space<vmem>>, %arg6: memref<64x6xbf16, #tpu.memory_space<vmem>>, %arg7: memref<1x6xf32, #tpu.memory_space<vmem>>, %arg8: memref<8x6xf32, #tpu.memory_space<vmem>>) attributes {dimension_semantics = [#tpu.dimension_semantics<parallel>], iteration_bounds = array<i64: 1>, scalar_prefetch = 0 : i64, scratch_operands = 0 : i64, tpu.core_type = #tpu.core_type<tc>, window_params = [{transform_indices = @transform_0, window_bounds = array<i64: 8, 187>}, {pipeline_mode = #tpu.pipeline_mode<synchronous>, transform_indices = @transform_1, window_bounds = array<i64: 187, 128>}, {pipeline_mode = #tpu.pipeline_mode<synchronous>, transform_indices = @transform_2, window_bounds = array<i64: 1, 128>}, {pipeline_mode = #tpu.pipeline_mode<synchronous>, transform_indices = @transform_3, window_bounds = array<i64: 128, 64>}, {pipeline_mode = #tpu.pipeline_mode<synchronous>, transform_indices = @transform_4, window_bounds = array<i64: 1, 64>}, {pipeline_mode = #tpu.pipeline_mode<synchronous>, transform_indices = @transform_5, window_bounds = array<i64: 64, 6>}, {pipeline_mode = #tpu.pipeline_mode<synchronous>, transform_indices = @transform_6, window_bounds = array<i64: 1, 6>}, {transform_indices = @transform_7, window_bounds = array<i64: 8, 6>}]} {
    %c0 = arith.constant 0 : index
    %c0_0 = arith.constant 0 : index
    %0 = vector.load %arg1[%c0, %c0_0] : memref<8x187xbf16, #tpu.memory_space<vmem>>, vector<8x187xbf16>
    %c0_1 = arith.constant 0 : index
    %c0_2 = arith.constant 0 : index
    %1 = vector.load %arg2[%c0_1, %c0_2] : memref<187x128xbf16, #tpu.memory_space<vmem>>, vector<187x128xbf16>
    %cst = arith.constant dense<0.000000e+00> : vector<8x128xf32>
    %2 = tpu.matmul %0, %1, %cst {dimension_numbers = #tpu.dot_dimension_numbers<[1], [0], [0], [1], [0, 0, 1, 1], [], []>} : vector<8x187xbf16>, vector<187x128xbf16>, vector<8x128xf32> -> vector<8x128xf32>
    %c0_3 = arith.constant 0 : index
    %c0_4 = arith.constant 0 : index
    %3 = vector.load %arg3[%c0_3, %c0_4] : memref<1x128xf32, #tpu.memory_space<vmem>>, vector<1x128xf32>
    %4 = vector.broadcast %3 : vector<1x128xf32> to vector<8x128xf32>
    %5 = arith.addf %2, %4 : vector<8x128xf32>
    %cst_5 = arith.constant 0.000000e+00 : f32
    %6 = vector.broadcast %cst_5 : f32 to vector<8x128xf32>
    %7 = arith.maximumf %5, %6 : vector<8x128xf32>
    %8 = arith.truncf %7 : vector<8x128xf32> to vector<8x128xbf16>
    %c0_6 = arith.constant 0 : index
    %c0_7 = arith.constant 0 : index
    %9 = vector.load %arg4[%c0_6, %c0_7] : memref<128x64xbf16, #tpu.memory_space<vmem>>, vector<128x64xbf16>
    %cst_8 = arith.constant dense<0.000000e+00> : vector<8x64xf32>
    %10 = tpu.matmul %8, %9, %cst_8 {dimension_numbers = #tpu.dot_dimension_numbers<[1], [0], [0], [1], [0, 0, 1, 1], [], []>} : vector<8x128xbf16>, vector<128x64xbf16>, vector<8x64xf32> -> vector<8x64xf32>
    %c0_9 = arith.constant 0 : index
    %c0_10 = arith.constant 0 : index
    %11 = vector.load %arg5[%c0_9, %c0_10] : memref<1x64xf32, #tpu.memory_space<vmem>>, vector<1x64xf32>
    %12 = vector.broadcast %11 : vector<1x64xf32> to vector<8x64xf32>
    %13 = arith.addf %10, %12 : vector<8x64xf32>
    %cst_11 = arith.constant 0.000000e+00 : f32
    %14 = vector.broadcast %cst_11 : f32 to vector<8x64xf32>
    %15 = arith.maximumf %13, %14 : vector<8x64xf32>
    %16 = arith.truncf %15 : vector<8x64xf32> to vector<8x64xbf16>
    %c0_12 = arith.constant 0 : index
    %c0_13 = arith.constant 0 : index
    %17 = vector.load %arg6[%c0_12, %c0_13] : memref<64x6xbf16, #tpu.memory_space<vmem>>, vector<64x6xbf16>
    %cst_14 = arith.constant dense<0.000000e+00> : vector<8x6xf32>
    %18 = tpu.matmul %16, %17, %cst_14 {dimension_numbers = #tpu.dot_dimension_numbers<[1], [0], [0], [1], [0, 0, 1, 1], [], []>} : vector<8x64xbf16>, vector<64x6xbf16>, vector<8x6xf32> -> vector<8x6xf32>
    %c0_15 = arith.constant 0 : index
    %c0_16 = arith.constant 0 : index
    %19 = vector.load %arg7[%c0_15, %c0_16] : memref<1x6xf32, #tpu.memory_space<vmem>>, vector<1x6xf32>
    %20 = vector.broadcast %19 : vector<1x6xf32> to vector<8x6xf32>
    %21 = arith.addf %18, %20 : vector<8x6xf32>
    %c0_17 = arith.constant 0 : index
    %c0_18 = arith.constant 0 : index
    %22 = vector.load %arg8[%c0_17, %c0_18] : memref<8x6xf32, #tpu.memory_space<vmem>>, vector<8x6xf32>
    tpu.vector_store %arg8[%c0_17, %c0_18], %21 {strides = array<i32>} : memref<8x6xf32, #tpu.memory_space<vmem>>, vector<8x6xf32>,
    return
  }
  func.func @transform_0(%arg0: i32) -> (i32, i32) {
    %c0_i32 = arith.constant 0 : i32
    %c0_i32_0 = arith.constant 0 : i32
    return %arg0, %c0_i32 : i32, i32
  }
  func.func @transform_1(%arg0: i32) -> (i32, i32) {
    %c0_i32 = arith.constant 0 : i32
    %c0_i32_0 = arith.constant 0 : i32
    %c0_i32_1 = arith.constant 0 : i32
    return %c0_i32, %c0_i32_0 : i32, i32
  }
  func.func @transform_2(%arg0: i32) -> (i32, i32) {
    %c0_i32 = arith.constant 0 : i32
    %c0_i32_0 = arith.constant 0 : i32
    %c0_i32_1 = arith.constant 0 : i32
    return %c0_i32, %c0_i32_0 : i32, i32
  }
  func.func @transform_3(%arg0: i32) -> (i32, i32) {
    %c0_i32 = arith.constant 0 : i32
    %c0_i32_0 = arith.constant 0 : i32
    %c0_i32_1 = arith.constant 0 : i32
    return %c0_i32, %c0_i32_0 : i32, i32
  }
  func.func @transform_4(%arg0: i32) -> (i32, i32) {
    %c0_i32 = arith.constant 0 : i32
    %c0_i32_0 = arith.constant 0 : i32
    %c0_i32_1 = arith.constant 0 : i32
    return %c0_i32, %c0_i32_0 : i32, i32
  }
  func.func @transform_5(%arg0: i32) -> (i32, i32) {
    %c0_i32 = arith.constant 0 : i32
    %c0_i32_0 = arith.constant 0 : i32
    %c0_i32_1 = arith.constant 0 : i32
    return %c0_i32, %c0_i32_0 : i32, i32
  }
  func.func @transform_6(%arg0: i32) -> (i32, i32) {
    %c0_i32 = arith.constant 0 : i32
    %c0_i32_0 = arith.constant 0 : i32
    %c0_i32_1 = arith.constant 0 : i32
    return %c0_i32, %c0_i32_0 : i32, i32
  }
  func.func @transform_7(%arg0: i32) -> (i32, i32) {
    %c0_i32 = arith.constant 0 : i32
    %c0_i32_0 = arith.constant 0 : i32
    return %arg0, %c0_i32 : i32, i32
  }
}

</mosaic_0001>

<llo_original>
// kernel: tpu_custom_call.1
$region0: #{tpu_custom_call.1}
  #allocation0 [shape = 'u32[]', space=smem, size = 0x4, offset = 0x4, fixed_abs, tag = 'smem constant byte address 0x4 - core index']
  #allocation1 [shape = 'u32[144,128]{1,0:T(1,128)}', space=vmem, size = 0x12000, scoped, tag = 'internal scratch']
  %s0 = inlined_call_operand.vmem [shape: bf16[8,187], index: 0, kind: input, shape index: {}]
  %s1 = inlined_call_operand.vmem [shape: bf16[187,128], index: 1, kind: input, shape index: {}]
  %s2 = inlined_call_operand.vmem [shape: f32[1,128], index: 2, kind: input, shape index: {}]
  %s3 = inlined_call_operand.vmem [shape: bf16[128,64], index: 3, kind: input, shape index: {}]
  %s4 = inlined_call_operand.vmem [shape: f32[1,64], index: 4, kind: input, shape index: {}]
  %s5 = inlined_call_operand.vmem [shape: bf16[64,6], index: 5, kind: input, shape index: {}]
  %s6 = inlined_call_operand.vmem [shape: f32[1,6], index: 6, kind: input, shape index: {}]
  %s7 = inlined_call_operand.hbm [shape: f32[8,6], index: 7, kind: output, shape index: {}]
  %s8 = sld [smem:[#allocation0]]
  $region38: #{tpu_custom_call.1} parent=0
    _
  %s10 = ssub.s32 1, %s8
  %s11 = scalar_select 0, %s10, %s8
  $region1: #{tpu_custom_call.1} parent=0
    #allocation2 [shape = 'u8[4096]{0}', space=vmem, size = 0x1000, scoped, tag = 'output window, operand 0, single buffered']
    #allocation3 [shape = 's32[1]{0}', space=sflag, size = 0x4, scoped, tag = 'scoped memory for tpu_custom_call.1']
    %12 = vsyncpa [#allocation3], 0
    // Predicated region
    $region2: #{tpu_custom_call.1} parent=1 // pred_check
      _
    $region3: #{tpu_custom_call.1} parent=1 // pred_check_branch
      %14 = sbr.rel (0) target = $region5
    $region4: #{tpu_custom_call.1} parent=1 // pred_region
      _
    $region5: #{tpu_custom_call.1} parent=1 // pred_fallthru
      _
    // Predicated region
    $region6: #{tpu_custom_call.1} parent=1 // pred_check
      _
    $region7: #{tpu_custom_call.1} parent=1 // pred_check_branch
      %16 = sbr.rel (0) target = $region9
    $region8: #{tpu_custom_call.1} parent=1 // pred_region
      _
    $region9: #{tpu_custom_call.1} parent=1 // pred_fallthru
      _
    // Predicated region
    $region10: #{tpu_custom_call.1} parent=1 // pred_check
      _
    $region11: #{tpu_custom_call.1} parent=1 // pred_check_branch
      %18 = sbr.rel (0) target = $region13
    $region12: #{tpu_custom_call.1} parent=1 // pred_region
      _
    $region13: #{tpu_custom_call.1} parent=1 // pred_fallthru
      _
    // Predicated region
    $region14: #{tpu_custom_call.1} parent=1 // pred_check
      _
    $region15: #{tpu_custom_call.1} parent=1 // pred_check_branch
      %20 = sbr.rel (0) target = $region17
    $region16: #{tpu_custom_call.1} parent=1 // pred_region
      _
    $region17: #{tpu_custom_call.1} parent=1 // pred_fallthru
      _
    // Predicated region
    $region18: #{tpu_custom_call.1} parent=1 // pred_check
      _
    $region19: #{tpu_custom_call.1} parent=1 // pred_check_branch
      %22 = sbr.rel (0) target = $region21
    $region20: #{tpu_custom_call.1} parent=1 // pred_region
      _
    $region21: #{tpu_custom_call.1} parent=1 // pred_fallthru
      _
    // Predicated region
    $region22: #{tpu_custom_call.1} parent=1 // pred_check
      _
    $region23: #{tpu_custom_call.1} parent=1 // pred_check_branch
      %24 = sbr.rel (0) target = $region25
    $region24: #{tpu_custom_call.1} parent=1 // pred_region
      _
    $region25: #{tpu_custom_call.1} parent=1 // pred_fallthru
      _
    // Predicated region
    $region26: #{tpu_custom_call.1} parent=1 // pred_check
      _
    $region27: #{tpu_custom_call.1} parent=1 // pred_check_branch
      %26 = sbr.rel (0) target = $region29
    $region28: #{tpu_custom_call.1} parent=1 // pred_region
      _
    $region29: #{tpu_custom_call.1} parent=1 // pred_fallthru
      _
    %v28 = vld [vmem:[%s0] sm:$0xff]
    %v29 = vld [vmem:[%s1] sm:$0xf]
    %v30 = vld [vmem:[%s1 + $0x4] sm:$0xf]
    %v31 = vld [vmem:[%s1 + $0x8] sm:$0xf]
    %v32 = vld [vmem:[%s1 + $0xc] sm:$0xf]
    %v33 = vld [vmem:[%s1 + $0x10] sm:$0xf]
    %v34 = vld [vmem:[%s1 + $0x14] sm:$0xf]
    %v35 = vld [vmem:[%s1 + $0x18] sm:$0xf]
    %v36 = vld [vmem:[%s1 + $0x1c] sm:$0xf]
    %v37 = vld [vmem:[%s1 + $0x20] sm:$0xf]
    %v38 = vld [vmem:[%s1 + $0x24] sm:$0xf]
    %v39 = vld [vmem:[%s1 + $0x28] sm:$0xf]
    %v40 = vld [vmem:[%s1 + $0x2c] sm:$0xf]
    %v41 = vld [vmem:[%s1 + $0x30] sm:$0xf]
    %v42 = vld [vmem:[%s1 + $0x34] sm:$0xf]
    %v43 = vld [vmem:[%s1 + $0x38] sm:$0xf]
    %v44 = vld [vmem:[%s1 + $0x3c] sm:$0xf]
    %v45 = vld [vmem:[%s1 + $0x40] sm:$0xf]
    %v46 = vld [vmem:[%s1 + $0x44] sm:$0xf]
    %v47 = vld [vmem:[%s1 + $0x48] sm:$0xf]
    %v48 = vld [vmem:[%s1 + $0x4c] sm:$0xf]
    %v49 = vld [vmem:[%s1 + $0x50] sm:$0xf]
    %v50 = vld [vmem:[%s1 + $0x54] sm:$0xf]
    %v51 = vld [vmem:[%s1 + $0x58] sm:$0xf]
    %v52 = vld [vmem:[%s1 + $0x5c] sm:$0x3]
    %v53 = vld [vmem:[%s2] sm:$0x1]
    %v55 = vlaneseq
    %v56 = vshrl.u32 %v55, 7
    %v57 = vsub.s32 0, %v56
    %v58 = vrot.slane %v53, %v57
    %v61 = vunpack.c.l.b16 %v28
    %v62 = vunpack.c.h.b16 %v28
    %v63 = vpack.c.b16 %v61, %v61
    %v64 = vpack.c.b16 %v62, %v62
    %v90 = vunpack.c.l.b16 %v29
    %v91 = vunpack.c.l.b16 %v30
    %v92 = vunpack.c.l.b16 %v31
    %v93 = vunpack.c.l.b16 %v32
    %v94 = vunpack.c.l.b16 %v33
    %v95 = vunpack.c.l.b16 %v34
    %v96 = vunpack.c.l.b16 %v35
    %v97 = vunpack.c.l.b16 %v36
    %v98 = vunpack.c.l.b16 %v37
    %v99 = vunpack.c.l.b16 %v38
    %v100 = vunpack.c.l.b16 %v39
    %v101 = vunpack.c.l.b16 %v40
    %v102 = vunpack.c.l.b16 %v41
    %v103 = vunpack.c.l.b16 %v42
    %v104 = vunpack.c.l.b16 %v43
    %v105 = vunpack.c.l.b16 %v44
    %v106 = vunpack.c.l.b16 %v45
    %v107 = vunpack.c.l.b16 %v46
    %v108 = vunpack.c.l.b16 %v47
    %v109 = vunpack.c.l.b16 %v48
    %v110 = vunpack.c.l.b16 %v49
    %v111 = vunpack.c.l.b16 %v50
    %v112 = vunpack.c.l.b16 %v51
    %v113 = vunpack.c.l.b16 %v52
    %v114 = vpack.c.b16 %v91, %v90
    %v115 = vpack.c.b16 %v93, %v92
    %v116 = vpack.c.b16 %v95, %v94
    %v117 = vpack.c.b16 %v97, %v96
    %v118 = vpack.c.b16 %v99, %v98
    %v119 = vpack.c.b16 %v101, %v100
    %v120 = vpack.c.b16 %v103, %v102
    %v121 = vpack.c.b16 %v105, %v104
    %v122 = vpack.c.b16 %v107, %v106
    %v123 = vpack.c.b16 %v109, %v108
    %v124 = vpack.c.b16 %v111, %v110
    %v125 = vpack.c.b16 %v113, %v112
    %vm137 = vcmask 482304
    %v139 = vsel %vm137, %v64, 0
    %vm141 = vcmask 1044480
    %vm142 = vcmask 1045504
    %v143 = vsel %vm141, 4294967295, 65535
    %v144 = vsel %vm142, %v143, 0
    %v146 = vand.u32 %v125, %v144
    %148 = vmatprep.subr.bf16.mxu0 0
    %149 = vmatpush1.bf16.msra.mxu0 %v114
    %150 = vmatprep.subr.bf16.mxu0 0
    %151 = vmatpush1.bf16.msra.mxu0 %v115
    %152 = vmatprep.subr.bf16.mxu0 0
    %153 = vmatpush1.bf16.msra.mxu0 %v116
    %154 = vmatprep.subr.bf16.mxu0 0
    %155 = vmatpush1.bf16.msra.mxu0 %v117
    %156 = vmatprep.subr.bf16.mxu0 0
    %157 = vmatpush1.bf16.msra.mxu0 %v118
    %158 = vmatprep.subr.bf16.mxu0 0
    %159 = vmatpush1.bf16.msra.mxu0 %v119
    %160 = vmatprep.subr.bf16.mxu0 0
    %161 = vmatpush1.bf16.msra.mxu0 %v120
    %162 = vmatprep.subr.bf16.mxu0 0
    %163 = vmatpush1.bf16.msra.mxu0 %v121
    %164 = vmatprep.subr.bf16.mxu0 0
    %165 = vmatpush1.bf16.msra.mxu0 %v122
    %166 = vmatprep.subr.bf16.mxu0 0
    %167 = vmatpush1.bf16.msra.mxu0 %v123
    %168 = vmatprep.subr.bf16.mxu0 0
    %169 = vmatpush1.bf16.msra.mxu0 %v124
    %170 = vmatprep.subr.bf16.mxu0 0
    %171 = vmatpush1.bf16.msra.mxu0 %v146
    %172 = vmatprep.subr.bf16.mxu0 0
    %173 = vmatpush1.bf16.msra.mxu0 0
    %174 = vmatprep.subr.bf16.mxu0 0
    %175 = vmatpush1.bf16.msra.mxu0 0
    %176 = vmatprep.subr.bf16.mxu0 0
    %177 = vmatpush1.bf16.msra.mxu0 0
    %178 = vmatprep.subr.bf16.mxu0 0
    %179 = vmatpush1.bf16.msra.mxu0 0
    %180 = vmatprep.mubr.bf16.mxu0 %v139
    %181 = vmatmul.mubr.bf16.gmra.mrb[0].mxu0 %v63
    %v182 = vpop.f32.mrb[0].mxu0
    %v183 = vadd.f32 %v58, %v182
    %v184 = vpop.f32.mrb[0].mxu0
    %v185 = vpop.f32.mrb[0].mxu0
    %v186 = vpop.f32.mrb[0].mxu0
    %187 = vdwg.mxu0
    %v188 = vmax.f32 %v183, 0.0
    %v189 = vpack.c.bf16 %v188, %v188
    %v190 = vld [vmem:[%s3] sm:$0xf]
    %v191 = vld [vmem:[%s3 + $0x4] sm:$0xf]
    %v192 = vld [vmem:[%s3 + $0x8] sm:$0xf]
    %v193 = vld [vmem:[%s3 + $0xc] sm:$0xf]
    %v194 = vld [vmem:[%s3 + $0x10] sm:$0xf]
    %v195 = vld [vmem:[%s3 + $0x14] sm:$0xf]
    %v196 = vld [vmem:[%s3 + $0x18] sm:$0xf]
    %v197 = vld [vmem:[%s3 + $0x1c] sm:$0xf]
    %v198 = vld [vmem:[%s3 + $0x20] sm:$0xf]
    %v199 = vld [vmem:[%s3 + $0x24] sm:$0xf]
    %v200 = vld [vmem:[%s3 + $0x28] sm:$0xf]
    %v201 = vld [vmem:[%s3 + $0x2c] sm:$0xf]
    %v202 = vld [vmem:[%s3 + $0x30] sm:$0xf]
    %v203 = vld [vmem:[%s3 + $0x34] sm:$0xf]
    %v204 = vld [vmem:[%s3 + $0x38] sm:$0xf]
    %v205 = vld [vmem:[%s3 + $0x3c] sm:$0xf]
    %v206 = vld [vmem:[%s4] sm:$0x1]
    %v208 = vlaneseq
    %v209 = vshrl.u32 %v208, 7
    %v210 = vsub.s32 0, %v209
    %v211 = vrot.slane %v206, %v210
    %v229 = vunpack.c.l.b16 %v190
    %v230 = vunpack.c.l.b16 %v191
    %v231 = vunpack.c.l.b16 %v192
    %v232 = vunpack.c.l.b16 %v193
    %v233 = vunpack.c.l.b16 %v194
    %v234 = vunpack.c.l.b16 %v195
    %v235 = vunpack.c.l.b16 %v196
    %v236 = vunpack.c.l.b16 %v197
    %v237 = vunpack.c.l.b16 %v198
    %v238 = vunpack.c.l.b16 %v199
    %v239 = vunpack.c.l.b16 %v200
    %v240 = vunpack.c.l.b16 %v201
    %v241 = vunpack.c.l.b16 %v202
    %v242 = vunpack.c.l.b16 %v203
    %v243 = vunpack.c.l.b16 %v204
    %v244 = vunpack.c.l.b16 %v205
    %v245 = vpack.c.b16 %v230, %v229
    %v246 = vpack.c.b16 %v232, %v231
    %v247 = vpack.c.b16 %v234, %v233
    %v248 = vpack.c.b16 %v236, %v235
    %v249 = vpack.c.b16 %v238, %v237
    %v250 = vpack.c.b16 %v240, %v239
    %v251 = vpack.c.b16 %v242, %v241
    %v252 = vpack.c.b16 %v244, %v243
    %261 = vmatprep.subr.bf16.mxu0 0
    %262 = vmatpush1.bf16.msra.mxu0 %v245
    %263 = vmatprep.subr.bf16.mxu0 0
    %264 = vmatpush1.bf16.msra.mxu0 %v246
    %265 = vmatprep.subr.bf16.mxu0 0
    %266 = vmatpush1.bf16.msra.mxu0 %v247
    %267 = vmatprep.subr.bf16.mxu0 0
    %268 = vmatpush1.bf16.msra.mxu0 %v248
    %269 = vmatprep.subr.bf16.mxu0 0
    %270 = vmatpush1.bf16.msra.mxu0 %v249
    %271 = vmatprep.subr.bf16.mxu0 0
    %272 = vmatpush1.bf16.msra.mxu0 %v250
    %273 = vmatprep.subr.bf16.mxu0 0
    %274 = vmatpush1.bf16.msra.mxu0 %v251
    %275 = vmatprep.subr.bf16.mxu0 0
    %276 = vmatpush1.bf16.msra.mxu0 %v252
    %277 = vmatprep.subr.bf16.mxu0 0
    %278 = vmatpush1.bf16.msra.mxu0 0
    %279 = vmatprep.subr.bf16.mxu0 0
    %280 = vmatpush1.bf16.msra.mxu0 0
    %281 = vmatprep.subr.bf16.mxu0 0
    %282 = vmatpush1.bf16.msra.mxu0 0
    %283 = vmatprep.subr.bf16.mxu0 0
    %284 = vmatpush1.bf16.msra.mxu0 0
    %285 = vmatprep.subr.bf16.mxu0 0
    %286 = vmatpush1.bf16.msra.mxu0 0
    %287 = vmatprep.subr.bf16.mxu0 0
    %288 = vmatpush1.bf16.msra.mxu0 0
    %289 = vmatprep.subr.bf16.mxu0 0
    %290 = vmatpush1.bf16.msra.mxu0 0
    %291 = vmatprep.subr.bf16.mxu0 0
    %292 = vmatpush1.bf16.msra.mxu0 0
    %293 = vmatprep.mubr.bf16.mxu0 0
    %294 = vmatmul.mubr.bf16.gmra.mrb[0].mxu0 %v189
    %v295 = vpop.f32.mrb[0].mxu0
    %v296 = vadd.f32 %v211, %v295
    %v297 = vpop.f32.mrb[0].mxu0
    %v298 = vpop.f32.mrb[0].mxu0
    %v299 = vpop.f32.mrb[0].mxu0
    %300 = vdwg.mxu0
    %v301 = vmax.f32 %v296, 0.0
    %v302 = vpack.c.bf16 %v301, %v301
    %v303 = vld [vmem:[%s5] sm:$0xf]
    %v304 = vld [vmem:[%s5 + $0x4] sm:$0xf]
    %v305 = vld [vmem:[%s5 + $0x8] sm:$0xf]
    %v306 = vld [vmem:[%s5 + $0xc] sm:$0xf]
    %v307 = vld [vmem:[%s5 + $0x10] sm:$0xf]
    %v308 = vld [vmem:[%s5 + $0x14] sm:$0xf]
    %v309 = vld [vmem:[%s5 + $0x18] sm:$0xf]
    %v310 = vld [vmem:[%s5 + $0x1c] sm:$0xf]
    %v311 = vld [vmem:[%s6] sm:$0x1]
    %v313 = vlaneseq
    %v314 = vshrl.u32 %v313, 7
    %v315 = vsub.s32 0, %v314
    %v316 = vrot.slane %v311, %v315
    %v326 = vunpack.c.l.b16 %v303
    %v327 = vunpack.c.l.b16 %v304
    %v328 = vunpack.c.l.b16 %v305
    %v329 = vunpack.c.l.b16 %v306
    %v330 = vunpack.c.l.b16 %v307
    %v331 = vunpack.c.l.b16 %v308
    %v332 = vunpack.c.l.b16 %v309
    %v333 = vunpack.c.l.b16 %v310
    %v334 = vpack.c.b16 %v327, %v326
    %v335 = vpack.c.b16 %v329, %v328
    %v336 = vpack.c.b16 %v331, %v330
    %v337 = vpack.c.b16 %v333, %v332
    %vm342 = vcmask 523264
    %v344 = vsel %vm342, %v302, 0
    %346 = vmatprep.subr.bf16.mxu0 0
    %347 = vmatpush1.bf16.msra.mxu0 %v334
    %348 = vmatprep.subr.bf16.mxu0 0
    %349 = vmatpush1.bf16.msra.mxu0 %v335
    %350 = vmatprep.subr.bf16.mxu0 0
    %351 = vmatpush1.bf16.msra.mxu0 %v336
    %352 = vmatprep.subr.bf16.mxu0 0
    %353 = vmatpush1.bf16.msra.mxu0 %v337
    %354 = vmatprep.subr.bf16.mxu0 0
    %355 = vmatpush1.bf16.msra.mxu0 0
    %356 = vmatprep.subr.bf16.mxu0 0
    %357 = vmatpush1.bf16.msra.mxu0 0
    %358 = vmatprep.subr.bf16.mxu0 0
    %359 = vmatpush1.bf16.msra.mxu0 0
    %360 = vmatprep.subr.bf16.mxu0 0
    %361 = vmatpush1.bf16.msra.mxu0 0
    %362 = vmatprep.subr.bf16.mxu0 0
    %363 = vmatpush1.bf16.msra.mxu0 0
    %364 = vmatprep.subr.bf16.mxu0 0
    %365 = vmatpush1.bf16.msra.mxu0 0
    %366 = vmatprep.subr.bf16.mxu0 0
    %367 = vmatpush1.bf16.msra.mxu0 0
    %368 = vmatprep.subr.bf16.mxu0 0
    %369 = vmatpush1.bf16.msra.mxu0 0
    %370 = vmatprep.subr.bf16.mxu0 0
    %371 = vmatpush1.bf16.msra.mxu0 0
    %372 = vmatprep.subr.bf16.mxu0 0
    %373 = vmatpush1.bf16.msra.mxu0 0
    %374 = vmatprep.subr.bf16.mxu0 0
    %375 = vmatpush1.bf16.msra.mxu0 0
    %376 = vmatprep.subr.bf16.mxu0 0
    %377 = vmatpush1.bf16.msra.mxu0 0
    %378 = vmatprep.mubr.bf16.mxu0 0
    %379 = vmatmul.mubr.bf16.gmra.mrb[0].mxu0 %v344
    %v380 = vpop.f32.mrb[0].mxu0
    %v381 = vadd.f32 %v316, %v380
    %v382 = vpop.f32.mrb[0].mxu0
    %v383 = vpop.f32.mrb[0].mxu0
    %v384 = vpop.f32.mrb[0].mxu0
    %385 = vdwg.mxu0
    %vm386 = vcmask 48128
    %387 = vst.msk [vmem:[#allocation2] sm:$0xff] %vm386, %v381
    // Predicated region
    $region30: #{tpu_custom_call.1} parent=1 // pred_check
      _
    $region31: #{tpu_custom_call.1} parent=1 // pred_check_branch
      %389 = sbr.rel (0) target = $region33
    $region32: #{tpu_custom_call.1} parent=1 // pred_region
      %s391 = ssub.s32 128, 128
      %392 = vsyncadd [#allocation3], %s391
      %s394 = sshll.u32 [#allocation2], 4
      %s395 = int_to_ptr.vmem [resolvable:$true] %s394
      %397 = dma.vmem_to_hbm [thread:$0]  %s395, 128, %s7, [#allocation3]
    $region33: #{tpu_custom_call.1} parent=1 // pred_fallthru
      _
    // Predicated region
    $region34: #{tpu_custom_call.1} parent=1 // pred_check
      _
    $region35: #{tpu_custom_call.1} parent=1 // pred_check_branch
      %399 = sbr.rel (0) target = $region37
    $region36: #{tpu_custom_call.1} parent=1 // pred_region
      %400 = dma.done [#allocation3], 128
    $region37: #{tpu_custom_call.1} parent=1 // pred_fallthru
      _
    %401 = vsyncpa [#allocation3], 1

</llo_original>
